<compile_context>
chip_gen: v7x
topology: tpu7x:2x2x1
jax: 0.10.0
libtpu: 0.0.40
codegen_flags: <defaults>
</compile_context>

<pallas_src>
import functools

import jax
import jax.numpy as jnp
from jax import lax
from jax.experimental import pallas as pl
from jax.experimental.pallas import tpu as pltpu


def _round_up(x, m):
    return (x + m - 1) // m * m


# ---------------------------------------------------------------------------
# Pallas kernels
# ---------------------------------------------------------------------------

def _gemm_bias_relu_kernel(p_ref, w_ref, b_ref, o_ref):
    # One conv layer as im2col GEMM: ReLU(patches @ W + b) on the MXU/VPU.
    acc = jnp.dot(p_ref[...], w_ref[...], preferred_element_type=jnp.float32)
    o_ref[...] = jnp.maximum(acc + b_ref[...], 0.0)


def _head_kernel(num_labels, x_ref, w_ref, b_ref, o_ref):
    x = x_ref[...]
    if num_labels == 1:
        # VPU multiply + XLU lane-reduce instead of an N=1 MXU matmul.
        logits = jnp.sum(x * w_ref[...], axis=-1, keepdims=True) + b_ref[...]
        o_ref[...] = jax.nn.sigmoid(logits)
    else:
        logits = jnp.dot(x, w_ref[...], preferred_element_type=jnp.float32)
        logits = logits + b_ref[...]
        m = jnp.max(logits, axis=-1, keepdims=True)
        e = jnp.exp(logits - m)
        o_ref[...] = e / jnp.sum(e, axis=-1, keepdims=True)


# ---------------------------------------------------------------------------
# Wrappers around pallas_call
# ---------------------------------------------------------------------------

_COMPILER_PARAMS = pltpu.CompilerParams(
    dimension_semantics=("parallel",),   # row tiles are independent
    vmem_limit_bytes=16 << 20,           # right-sized: safe on v7x (64 MiB VMEM)
)


def _conv_gemm_bias_relu(patches, w_mat, bias):
    """ReLU(patches @ w_mat + bias) with a row-tiled 'parallel' grid."""
    M, K = patches.shape
    N = w_mat.shape[1]

    TM = 256
    if M > TM:
        Mp = _round_up(M, TM)
        if Mp != M:
            patches = jnp.pad(patches, ((0, Mp - M), (0, 0)))
        block_m = TM
    else:
        Mp = M
        block_m = M
    grid_m = Mp // block_m

    out = pl.pallas_call(
        _gemm_bias_relu_kernel,
        out_shape=jax.ShapeDtypeStruct((Mp, N), jnp.float32),
        grid=(grid_m,),
        in_specs=[
            pl.BlockSpec((block_m, K), lambda i: (i, 0)),
            pl.BlockSpec((K, N), lambda i: (0, 0)),   # weight resident across tiles
            pl.BlockSpec((1, N), lambda i: (0, 0)),   # bias resident across tiles
        ],
        out_specs=pl.BlockSpec((block_m, N), lambda i: (i, 0)),
        compiler_params=_COMPILER_PARAMS,
    )(patches, w_mat, bias)
    return out[:M]


def _linear_head(feats, w5, b5, num_labels):
    B, F = feats.shape
    w_arg = w5.reshape(1, F) if num_labels == 1 else w5
    return pl.pallas_call(
        functools.partial(_head_kernel, num_labels),
        out_shape=jax.ShapeDtypeStruct((B, num_labels), jnp.float32),
        grid=(1,),
        in_specs=[
            pl.BlockSpec((B, F), lambda i: (0, 0)),
            pl.BlockSpec(w_arg.shape, lambda i: (0, 0)),
            pl.BlockSpec((1, num_labels), lambda i: (0, 0)),
        ],
        out_specs=pl.BlockSpec((B, num_labels), lambda i: (0, 0)),
        compiler_params=pltpu.CompilerParams(
            dimension_semantics=("arbitrary",),
            vmem_limit_bytes=16 << 20,
        ),
    )(feats, w_arg, b5)


# ---------------------------------------------------------------------------
# Layout plumbing (plain JAX, outside the kernels)
# ---------------------------------------------------------------------------

def _im2col_5x5_s2(x):
    """x: (B, H, W, C) -> patches (B*Ho*Wo, 25*C); feature order (kh, kw, c)."""
    # TODO(synk): for large imSize, fold this patch extraction into the kernel
    # via strided in-kernel DMA (pl.ds stride) instead of materializing the
    # 25x-expanded patch tensor in HBM.
    B, H, W, C = x.shape
    assert H % 2 == 0 and W % 2 == 0, "imSize must be a multiple of 16"
    Ho, Wo = H // 2, W // 2
    xp = jnp.pad(x, ((0, 0), (2, 2), (2, 2), (0, 0)))
    taps = []
    for kh in range(5):
        for kw in range(5):
            taps.append(xp[:, kh:kh + 2 * Ho:2, kw:kw + 2 * Wo:2, :])
    col = jnp.concatenate(taps, axis=-1)               # (B, Ho, Wo, 25*C)
    return col.reshape(B * Ho * Wo, 25 * C), (B, Ho, Wo)


# ---------------------------------------------------------------------------
# Forward pass, parameter init, reference
# ---------------------------------------------------------------------------

def discriminator_forward(x_nchw, params, num_labels=1):
    """x_nchw: (B, 3, imSize, imSize) float32 -> (B, numLabels)."""
    h = jnp.transpose(x_nchw, (0, 2, 3, 1)).astype(jnp.float32)   # NCHW -> NHWC
    for i in (1, 2, 3, 4):
        w = params[f"w{i}"]                      # (5, 5, Cin, Cout)  HWIO
        b = params[f"b{i}"]                      # (1, Cout)
        cin, cout = w.shape[2], w.shape[3]
        patches, (B, Ho, Wo) = _im2col_5x5_s2(h)
        out = _conv_gemm_bias_relu(patches, w.reshape(25 * cin, cout), b)
        h = out.reshape(B, Ho, Wo, cout)
    feats = h.reshape(h.shape[0], -1)            # (B, inSize*inSize*8f), (h,w,c) order
    return _linear_head(feats, params["w5"], params["b5"], num_labels)


def init_discriminator_params(key, im_size, f_size=2, num_labels=1):
    """Deterministic synthetic parameters (PyTorch-style uniform fan-in init)."""
    in_size = im_size // 16
    ks = jax.random.split(key, 10)

    def conv(kw, kb, cin, cout):
        bound = (cin * 25) ** -0.5
        w = jax.random.uniform(kw, (5, 5, cin, cout), jnp.float32, -bound, bound)
        b = jax.random.uniform(kb, (1, cout), jnp.float32, -bound, bound)
        return w, b

    w1, b1 = conv(ks[0], ks[1], 3, f_size)
    w2, b2 = conv(ks[2], ks[3], f_size, f_size * 2)
    w3, b3 = conv(ks[4], ks[5], f_size * 2, f_size * 4)
    w4, b4 = conv(ks[6], ks[7], f_size * 4, f_size * 8)
    feat = f_size * 8 * in_size * in_size
    bound = feat ** -0.5
    w5 = jax.random.uniform(ks[8], (feat, num_labels), jnp.float32, -bound, bound)
    b5 = jax.random.uniform(ks[9], (1, num_labels), jnp.float32, -bound, bound)
    return {"w1": w1, "b1": b1, "w2": w2, "b2": b2, "w3": w3, "b3": b3,
            "w4": w4, "b4": b4, "w5": w5, "b5": b5}


def discriminator_ref(x_nchw, params, num_labels=1):
    """Pure-JAX reference (lax.conv) with the same weights/layout."""
    h = jnp.transpose(x_nchw, (0, 2, 3, 1)).astype(jnp.float32)
    for i in (1, 2, 3, 4):
        w = params[f"w{i}"]
        b = params[f"b{i}"]
        h = lax.conv_general_dilated(
            h, w, window_strides=(2, 2), padding=((2, 2), (2, 2)),
            dimension_numbers=("NHWC", "HWIO", "NHWC"),
            precision=lax.Precision.HIGHEST)
        h = jnp.maximum(h + b.reshape(1, 1, 1, -1), 0.0)
    feats = h.reshape(h.shape[0], -1)
    logits = jnp.dot(feats, params["w5"], precision=lax.Precision.HIGHEST)
    logits = logits + params["b5"]
    if num_labels == 1:
        return jax.nn.sigmoid(logits)
    return jax.nn.softmax(logits, axis=-1)


if __name__ == "__main__":
    B, IM_SIZE, F_SIZE, NUM_LABELS = 2, 16, 2, 1

    key = jax.random.PRNGKey(0)
    k_params, k_x = jax.random.split(key)
    params = init_discriminator_params(k_params, IM_SIZE, F_SIZE, NUM_LABELS)
    x = jax.random.normal(k_x, (B, 3, IM_SIZE, IM_SIZE), jnp.float32)

    out = discriminator_forward(x, params, NUM_LABELS)
    out = jax.block_until_ready(out)

    ref = discriminator_ref(x, params, NUM_LABELS)
    assert out.shape == (B, NUM_LABELS)
    assert jnp.allclose(out, ref, atol=1e-4, rtol=1e-4), (out, ref)

    print("KERNEL_OK")
</pallas_src>

<mosaic_0001>
module attributes {stable_mosaic.version = 11 : i64} {
  func.func @_gemm_bias_relu_kernel(%arg0: i32, %arg1: memref<128x75xf32, #tpu.memory_space<vmem>>, %arg2: memref<75x2xf32, #tpu.memory_space<vmem>>, %arg3: memref<1x2xf32, #tpu.memory_space<vmem>>, %arg4: memref<128x2xf32, #tpu.memory_space<vmem>>) attributes {dimension_semantics = [#tpu.dimension_semantics<parallel>], iteration_bounds = array<i64: 1>, scalar_prefetch = 0 : i64, scratch_operands = 0 : i64, tpu.core_type = #tpu.core_type<tc>, window_params = [{transform_indices = @transform_0, window_bounds = array<i64: 128, 75>}, {pipeline_mode = #tpu.pipeline_mode<synchronous>, transform_indices = @transform_1, window_bounds = array<i64: 75, 2>}, {pipeline_mode = #tpu.pipeline_mode<synchronous>, transform_indices = @transform_2, window_bounds = array<i64: 1, 2>}, {transform_indices = @transform_3, window_bounds = array<i64: 128, 2>}]} {
    %c0 = arith.constant 0 : index
    %c0_0 = arith.constant 0 : index
    %0 = vector.load %arg1[%c0, %c0_0] : memref<128x75xf32, #tpu.memory_space<vmem>>, vector<128x75xf32>
    %c0_1 = arith.constant 0 : index
    %c0_2 = arith.constant 0 : index
    %1 = vector.load %arg2[%c0_1, %c0_2] : memref<75x2xf32, #tpu.memory_space<vmem>>, vector<75x2xf32>
    %cst = arith.constant dense<0.000000e+00> : vector<128x2xf32>
    %2 = tpu.matmul %0, %1, %cst {dimension_numbers = #tpu.dot_dimension_numbers<[1], [0], [0], [1], [0, 0, 1, 1], [], []>} : vector<128x75xf32>, vector<75x2xf32>, vector<128x2xf32> -> vector<128x2xf32>
    %c0_3 = arith.constant 0 : index
    %c0_4 = arith.constant 0 : index
    %3 = vector.load %arg3[%c0_3, %c0_4] : memref<1x2xf32, #tpu.memory_space<vmem>>, vector<1x2xf32>
    %4 = vector.broadcast %3 : vector<1x2xf32> to vector<128x2xf32>
    %5 = arith.addf %2, %4 : vector<128x2xf32>
    %cst_5 = arith.constant 0.000000e+00 : f32
    %6 = vector.broadcast %cst_5 : f32 to vector<128x2xf32>
    %7 = arith.maximumf %5, %6 : vector<128x2xf32>
    %c0_6 = arith.constant 0 : index
    %c0_7 = arith.constant 0 : index
    %8 = vector.load %arg4[%c0_6, %c0_7] : memref<128x2xf32, #tpu.memory_space<vmem>>, vector<128x2xf32>
    tpu.vector_store %arg4[%c0_6, %c0_7], %7 {strides = array<i32>} : memref<128x2xf32, #tpu.memory_space<vmem>>, vector<128x2xf32>,
    return
  }
  func.func @transform_0(%arg0: i32) -> (i32, i32) {
    %c0_i32 = arith.constant 0 : i32
    %c0_i32_0 = arith.constant 0 : i32
    return %arg0, %c0_i32 : i32, i32
  }
  func.func @transform_1(%arg0: i32) -> (i32, i32) {
    %c0_i32 = arith.constant 0 : i32
    %c0_i32_0 = arith.constant 0 : i32
    %c0_i32_1 = arith.constant 0 : i32
    return %c0_i32, %c0_i32_0 : i32, i32
  }
  func.func @transform_2(%arg0: i32) -> (i32, i32) {
    %c0_i32 = arith.constant 0 : i32
    %c0_i32_0 = arith.constant 0 : i32
    %c0_i32_1 = arith.constant 0 : i32
    return %c0_i32, %c0_i32_0 : i32, i32
  }
  func.func @transform_3(%arg0: i32) -> (i32, i32) {
    %c0_i32 = arith.constant 0 : i32
    %c0_i32_0 = arith.constant 0 : i32
    return %arg0, %c0_i32 : i32, i32
  }
}

</mosaic_0001>

<llo_original>
// kernel: tpu_custom_call.1
$region0: #{tpu_custom_call.1}
  #allocation0 [shape = 'u32[]', space=smem, size = 0x4, offset = 0x4, fixed_abs, tag = 'smem constant byte address 0x4 - core index']
  #allocation1 [shape = 'u32[144,128]{1,0:T(1,128)}', space=vmem, size = 0x12000, scoped, tag = 'internal scratch']
  %s0 = inlined_call_operand.vmem [shape: f32[128,75], index: 0, kind: input, shape index: {}]
  %s1 = inlined_call_operand.vmem [shape: f32[75,2], index: 1, kind: input, shape index: {}]
  %s2 = inlined_call_operand.vmem [shape: f32[1,2], index: 2, kind: input, shape index: {}]
  %s3 = inlined_call_operand.vmem [shape: f32[128,2], index: 3, kind: output, shape index: {}]
  %s4 = sld [smem:[#allocation0]]
  $region22: #{tpu_custom_call.1} parent=0
    _
  %s6 = ssub.s32 1, %s4
  %s7 = scalar_select 0, %s6, %s4
  // Predicated region
  $region2: #{tpu_custom_call.1} parent=0 // pred_check
    _
  $region3: #{tpu_custom_call.1} parent=0 // pred_check_branch
    %9 = sbr.rel (0) target = $region5
  $region4: #{tpu_custom_call.1} parent=0 // pred_region
    _
  $region5: #{tpu_custom_call.1} parent=0 // pred_fallthru
    _
  // Predicated region
  $region6: #{tpu_custom_call.1} parent=0 // pred_check
    _
  $region7: #{tpu_custom_call.1} parent=0 // pred_check_branch
    %11 = sbr.rel (0) target = $region9
  $region8: #{tpu_custom_call.1} parent=0 // pred_region
    _
  $region9: #{tpu_custom_call.1} parent=0 // pred_fallthru
    _
  // Predicated region
  $region10: #{tpu_custom_call.1} parent=0 // pred_check
    _
  $region11: #{tpu_custom_call.1} parent=0 // pred_check_branch
    %13 = sbr.rel (0) target = $region13
  $region12: #{tpu_custom_call.1} parent=0 // pred_region
    _
  $region13: #{tpu_custom_call.1} parent=0 // pred_fallthru
    _
  %v14 = vld [vmem:[%s0] sm:$0xff]
  %v15 = vld [vmem:[%s0 + $0x8] sm:$0xff]
  %v16 = vld [vmem:[%s0 + $0x10] sm:$0xff]
  %v17 = vld [vmem:[%s0 + $0x18] sm:$0xff]
  %v18 = vld [vmem:[%s0 + $0x20] sm:$0xff]
  %v19 = vld [vmem:[%s0 + $0x28] sm:$0xff]
  %v20 = vld [vmem:[%s0 + $0x30] sm:$0xff]
  %v21 = vld [vmem:[%s0 + $0x38] sm:$0xff]
  %v22 = vld [vmem:[%s0 + $0x40] sm:$0xff]
  %v23 = vld [vmem:[%s0 + $0x48] sm:$0xff]
  %v24 = vld [vmem:[%s0 + $0x50] sm:$0xff]
  %v25 = vld [vmem:[%s0 + $0x58] sm:$0xff]
  %v26 = vld [vmem:[%s0 + $0x60] sm:$0xff]
  %v27 = vld [vmem:[%s0 + $0x68] sm:$0xff]
  %v28 = vld [vmem:[%s0 + $0x70] sm:$0xff]
  %v29 = vld [vmem:[%s0 + $0x78] sm:$0xff]
  %v30 = vld [vmem:[%s1] sm:$0xff]
  %v31 = vld [vmem:[%s1 + $0x8] sm:$0xff]
  %v32 = vld [vmem:[%s1 + $0x10] sm:$0xff]
  %v33 = vld [vmem:[%s1 + $0x18] sm:$0xff]
  %v34 = vld [vmem:[%s1 + $0x20] sm:$0xff]
  %v35 = vld [vmem:[%s1 + $0x28] sm:$0xff]
  %v36 = vld [vmem:[%s1 + $0x30] sm:$0xff]
  %v37 = vld [vmem:[%s1 + $0x38] sm:$0xff]
  %v38 = vld [vmem:[%s1 + $0x40] sm:$0xff]
  %v39 = vld [vmem:[%s1 + $0x48] sm:$0x7]
  %v40 = vld [vmem:[%s2] sm:$0x1]
  %v42 = vlaneseq
  %v43 = vshrl.u32 %v42, 7
  %v44 = vsub.s32 0, %v43
  %v45 = vrot.slane %v40, %v44
  %vm47 = vcmask 613376
  %v49 = vsel %vm47, %v14, 0
  %v52 = vsel %vm47, %v15, 0
  %v55 = vsel %vm47, %v16, 0
  %v58 = vsel %vm47, %v17, 0
  %v61 = vsel %vm47, %v18, 0
  %v64 = vsel %vm47, %v19, 0
  %v67 = vsel %vm47, %v20, 0
  %v70 = vsel %vm47, %v21, 0
  %v73 = vsel %vm47, %v22, 0
  %v76 = vsel %vm47, %v23, 0
  %v79 = vsel %vm47, %v24, 0
  %v82 = vsel %vm47, %v25, 0
  %v85 = vsel %vm47, %v26, 0
  %v88 = vsel %vm47, %v27, 0
  %v91 = vsel %vm47, %v28, 0
  %v94 = vsel %vm47, %v29, 0
  %vm96 = vcmask 1042432
  %v98 = vsel %vm96, %v39, 0
  %100 = vmatprep.subr.mxu0 0.0
  %101 = vmatpush1.msra.mxu0 %v30
  %102 = vmatprep.subr.mxu0 0.0
  %103 = vmatpush1.msra.mxu0 %v31
  %104 = vmatprep.subr.mxu0 0.0
  %105 = vmatpush1.msra.mxu0 %v32
  %106 = vmatprep.subr.mxu0 0.0
  %107 = vmatpush1.msra.mxu0 %v33
  %108 = vmatprep.subr.mxu0 0.0
  %109 = vmatpush1.msra.mxu0 %v34
  %110 = vmatprep.subr.mxu0 0.0
  %111 = vmatpush1.msra.mxu0 %v35
  %112 = vmatprep.subr.mxu0 0.0
  %113 = vmatpush1.msra.mxu0 %v36
  %114 = vmatprep.subr.mxu0 0.0
  %115 = vmatpush1.msra.mxu0 %v37
  %116 = vmatprep.subr.mxu0 0.0
  %117 = vmatpush1.msra.mxu0 %v38
  %118 = vmatprep.subr.mxu0 0.0
  %119 = vmatpush1.msra.mxu0 %v98
  %120 = vmatprep.subr.mxu0 0.0
  %121 = vmatpush1.msra.mxu0 0.0
  %122 = vmatprep.subr.mxu0 0.0
  %123 = vmatpush1.msra.mxu0 0.0
  %124 = vmatprep.subr.mxu0 0.0
  %125 = vmatpush1.msra.mxu0 0.0
  %126 = vmatprep.subr.mxu0 0.0
  %127 = vmatpush1.msra.mxu0 0.0
  %128 = vmatprep.subr.mxu0 0.0
  %129 = vmatpush1.msra.mxu0 0.0
  %130 = vmatprep.subr.mxu0 0.0
  %131 = vmatpush1.msra.mxu0 0.0
  %132 = vmatprep.subr.mxu0 0.0
  %133 = vmatpush1.msra.mxu0 0.0
  %134 = vmatprep.subr.mxu0 0.0
  %135 = vmatpush1.msra.mxu0 0.0
  %136 = vmatprep.subr.mxu0 0.0
  %137 = vmatpush1.msra.mxu0 0.0
  %138 = vmatprep.subr.mxu0 0.0
  %139 = vmatpush1.msra.mxu0 0.0
  %140 = vmatprep.subr.mxu0 0.0
  %141 = vmatpush1.msra.mxu0 0.0
  %142 = vmatprep.subr.mxu0 0.0
  %143 = vmatpush1.msra.mxu0 0.0
  %144 = vmatprep.subr.mxu0 0.0
  %145 = vmatpush1.msra.mxu0 0.0
  %146 = vmatprep.subr.mxu0 0.0
  %147 = vmatpush1.msra.mxu0 0.0
  %148 = vmatprep.subr.mxu0 0.0
  %149 = vmatpush1.msra.mxu0 0.0
  %150 = vmatprep.subr.mxu0 0.0
  %151 = vmatpush1.msra.mxu0 0.0
  %152 = vmatprep.subr.mxu0 0.0
  %153 = vmatpush1.msra.mxu0 0.0
  %154 = vmatprep.subr.mxu0 0.0
  %155 = vmatpush1.msra.mxu0 0.0
  %156 = vmatprep.subr.mxu0 0.0
  %157 = vmatpush1.msra.mxu0 0.0
  %158 = vmatprep.subr.mxu0 0.0
  %159 = vmatpush1.msra.mxu0 0.0
  %160 = vmatprep.subr.mxu0 0.0
  %161 = vmatpush1.msra.mxu0 0.0
  %162 = vmatprep.subr.mxu0 0.0
  %163 = vmatpush1.msra.mxu0 0.0
  %164 = vmatprep.mubr.f32.mxu0 0.0
  %165 = vmatmul.mubr.f32.gmra.mrb[0].mxu0 %v49
  %v166 = vpop.f32.mrb[0].mxu0
  %v167 = vadd.f32 %v45, %v166
  %v168 = vpop.f32.mrb[0].mxu0
  %169 = vmatprep.mubr.f32.mxu0 0.0
  %170 = vmatmul.mubr.f32.gmra.mrb[0].mxu0 %v52
  %v171 = vpop.f32.mrb[0].mxu0
  %v172 = vadd.f32 %v45, %v171
  %v173 = vpop.f32.mrb[0].mxu0
  %174 = vmatprep.mubr.f32.mxu0 0.0
  %175 = vmatmul.mubr.f32.gmra.mrb[0].mxu0 %v55
  %v176 = vpop.f32.mrb[0].mxu0
  %v177 = vadd.f32 %v45, %v176
  %v178 = vpop.f32.mrb[0].mxu0
  %179 = vmatprep.mubr.f32.mxu0 0.0
  %180 = vmatmul.mubr.f32.gmra.mrb[0].mxu0 %v58
  %v181 = vpop.f32.mrb[0].mxu0
  %v182 = vadd.f32 %v45, %v181
  %v183 = vpop.f32.mrb[0].mxu0
  %184 = vmatprep.mubr.f32.mxu0 0.0
  %185 = vmatmul.mubr.f32.gmra.mrb[0].mxu0 %v61
  %v186 = vpop.f32.mrb[0].mxu0
  %v187 = vadd.f32 %v45, %v186
  %v188 = vpop.f32.mrb[0].mxu0
  %189 = vmatprep.mubr.f32.mxu0 0.0
  %190 = vmatmul.mubr.f32.gmra.mrb[0].mxu0 %v64
  %v191 = vpop.f32.mrb[0].mxu0
  %v192 = vadd.f32 %v45, %v191
  %v193 = vpop.f32.mrb[0].mxu0
  %194 = vmatprep.mubr.f32.mxu0 0.0
  %195 = vmatmul.mubr.f32.gmra.mrb[0].mxu0 %v67
  %v196 = vpop.f32.mrb[0].mxu0
  %v197 = vadd.f32 %v45, %v196
  %v198 = vpop.f32.mrb[0].mxu0
  %199 = vmatprep.mubr.f32.mxu0 0.0
  %200 = vmatmul.mubr.f32.gmra.mrb[0].mxu0 %v70
  %v201 = vpop.f32.mrb[0].mxu0
  %v202 = vadd.f32 %v45, %v201
  %v203 = vpop.f32.mrb[0].mxu0
  %204 = vmatprep.mubr.f32.mxu0 0.0
  %205 = vmatmul.mubr.f32.gmra.mrb[0].mxu0 %v73
  %v206 = vpop.f32.mrb[0].mxu0
  %v207 = vadd.f32 %v45, %v206
  %v208 = vpop.f32.mrb[0].mxu0
  %209 = vmatprep.mubr.f32.mxu0 0.0
  %210 = vmatmul.mubr.f32.gmra.mrb[0].mxu0 %v76
  %v211 = vpop.f32.mrb[0].mxu0
  %v212 = vadd.f32 %v45, %v211
  %v213 = vpop.f32.mrb[0].mxu0
  %214 = vmatprep.mubr.f32.mxu0 0.0
  %215 = vmatmul.mubr.f32.gmra.mrb[0].mxu0 %v79
  %v216 = vpop.f32.mrb[0].mxu0
  %v217 = vadd.f32 %v45, %v216
  %v218 = vpop.f32.mrb[0].mxu0
  %219 = vmatprep.mubr.f32.mxu0 0.0
  %220 = vmatmul.mubr.f32.gmra.mrb[0].mxu0 %v82
  %v221 = vpop.f32.mrb[0].mxu0
  %v222 = vadd.f32 %v45, %v221
  %v223 = vpop.f32.mrb[0].mxu0
  %224 = vmatprep.mubr.f32.mxu0 0.0
  %225 = vmatmul.mubr.f32.gmra.mrb[0].mxu0 %v85
  %v226 = vpop.f32.mrb[0].mxu0
  %v227 = vadd.f32 %v45, %v226
  %v228 = vpop.f32.mrb[0].mxu0
  %229 = vmatprep.mubr.f32.mxu0 0.0
  %230 = vmatmul.mubr.f32.gmra.mrb[0].mxu0 %v88
  %v231 = vpop.f32.mrb[0].mxu0
  %v232 = vadd.f32 %v45, %v231
  %v233 = vpop.f32.mrb[0].mxu0
  %234 = vmatprep.mubr.f32.mxu0 0.0
  %235 = vmatmul.mubr.f32.gmra.mrb[0].mxu0 %v91
  %v236 = vpop.f32.mrb[0].mxu0
  %v237 = vadd.f32 %v45, %v236
  %v238 = vpop.f32.mrb[0].mxu0
  %239 = vmatprep.mubr.f32.mxu0 0.0
  %240 = vmatmul.mubr.f32.gmra.mrb[0].mxu0 %v94
  %v241 = vpop.f32.mrb[0].mxu0
  %v242 = vadd.f32 %v45, %v241
  %v243 = vpop.f32.mrb[0].mxu0
  %244 = vdwg.mxu0
  %v245 = vmax.f32 %v167, 0.0
  %v246 = vmax.f32 %v172, 0.0
  %v247 = vmax.f32 %v177, 0.0
  %v248 = vmax.f32 %v182, 0.0
  %v249 = vmax.f32 %v187, 0.0
  %v250 = vmax.f32 %v192, 0.0
  %v251 = vmax.f32 %v197, 0.0
  %v252 = vmax.f32 %v202, 0.0
  %v253 = vmax.f32 %v207, 0.0
  %v254 = vmax.f32 %v212, 0.0
  %v255 = vmax.f32 %v217, 0.0
  %v256 = vmax.f32 %v222, 0.0
  %v257 = vmax.f32 %v227, 0.0
  %v258 = vmax.f32 %v232, 0.0
  %v259 = vmax.f32 %v237, 0.0
  %v260 = vmax.f32 %v242, 0.0
  %vm261 = vcmask 15360
  %262 = vst.msk [vmem:[%s3] sm:$0xff] %vm261, %v245
  %263 = vst.msk [vmem:[%s3 + $0x8] sm:$0xff] %vm261, %v246
  %264 = vst.msk [vmem:[%s3 + $0x10] sm:$0xff] %vm261, %v247
  %265 = vst.msk [vmem:[%s3 + $0x18] sm:$0xff] %vm261, %v248
  %266 = vst.msk [vmem:[%s3 + $0x20] sm:$0xff] %vm261, %v249
  %267 = vst.msk [vmem:[%s3 + $0x28] sm:$0xff] %vm261, %v250
  %268 = vst.msk [vmem:[%s3 + $0x30] sm:$0xff] %vm261, %v251
  %269 = vst.msk [vmem:[%s3 + $0x38] sm:$0xff] %vm261, %v252
  %270 = vst.msk [vmem:[%s3 + $0x40] sm:$0xff] %vm261, %v253
  %271 = vst.msk [vmem:[%s3 + $0x48] sm:$0xff] %vm261, %v254
  %272 = vst.msk [vmem:[%s3 + $0x50] sm:$0xff] %vm261, %v255
  %273 = vst.msk [vmem:[%s3 + $0x58] sm:$0xff] %vm261, %v256
  %274 = vst.msk [vmem:[%s3 + $0x60] sm:$0xff] %vm261, %v257
  %275 = vst.msk [vmem:[%s3 + $0x68] sm:$0xff] %vm261, %v258
  %276 = vst.msk [vmem:[%s3 + $0x70] sm:$0xff] %vm261, %v259
  %277 = vst.msk [vmem:[%s3 + $0x78] sm:$0xff] %vm261, %v260
  // Predicated region
  $region14: #{tpu_custom_call.1} parent=0 // pred_check
    _
  $region15: #{tpu_custom_call.1} parent=0 // pred_check_branch
    %279 = sbr.rel (0) target = $region17
  $region16: #{tpu_custom_call.1} parent=0 // pred_region
    _
  $region17: #{tpu_custom_call.1} parent=0 // pred_fallthru
    _
  // Predicated region
  $region18: #{tpu_custom_call.1} parent=0 // pred_check
    _
  $region19: #{tpu_custom_call.1} parent=0 // pred_check_branch
    %281 = sbr.rel (0) target = $region21
  $region20: #{tpu_custom_call.1} parent=0 // pred_region
    _
  $region21: #{tpu_custom_call.1} parent=0 // pred_fallthru
    _

</llo_original>
